<compile_context>
chip_gen: v7x
topology: tpu7x:2x2x1
jax: 0.10.0
libtpu: 0.0.40
codegen_flags: <defaults>
</compile_context>

<pallas_src>
import functools

import jax
import jax.numpy as jnp
from jax.experimental import pallas as pl
from jax.experimental.pallas import tpu as pltpu

HIDDEN = 256


def _round_up(x: int, m: int) -> int:
    return ((x + m - 1) // m) * m


def actor_kernel(x_ref, w1_ref, b1_ref, w2_ref, b2_ref, w3_ref, b3_ref, o_ref):
    # Layer 1: Linear + ReLU  (bf16 inputs, f32 accumulation on the MXU)
    h1 = jnp.dot(x_ref[...], w1_ref[...], preferred_element_type=jnp.float32)
    h1 = jnp.maximum(h1 + b1_ref[...], 0.0).astype(jnp.bfloat16)

    # Layer 2: Linear + ReLU
    h2 = jnp.dot(h1, w2_ref[...], preferred_element_type=jnp.float32)
    h2 = jnp.maximum(h2 + b2_ref[...], 0.0).astype(jnp.bfloat16)

    # Layer 3: Linear + tanh
    h3 = jnp.dot(h2, w3_ref[...], preferred_element_type=jnp.float32)
    o_ref[...] = jnp.tanh(h3 + b3_ref[...])


@functools.partial(jax.jit, static_argnames=("tb",))
def actor_forward(state, params, *, tb=None):
    """state: (B, state_size) f32; params: dict with w{1,2,3} (in, out) and
    b{1,2,3} (1, out). Returns (B, action_size) f32."""
    B, S = state.shape
    A = params["w3"].shape[1]

    # Lane-dense padding of the K (state) and N (action) dims.
    SP = _round_up(max(S, 1), 128)
    AP = _round_up(max(A, 1), 128)

    # Batch tile: 256 fills an MXU pass on v6e/v7x; for tiny batches just pad
    # to the 8-sublane granularity (single grid step, no wasted compute).
    if tb is None:
        tb = 256 if B >= 256 else max(_round_up(B, 8), 8)
    B_pad = _round_up(B, tb)
    grid = (B_pad // tb,)

    # Pad + cast inputs (zeros in the padded K/N slots keep the math exact).
    x = jnp.zeros((B_pad, SP), jnp.bfloat16).at[:B, :S].set(
        state.astype(jnp.bfloat16))
    w1 = jnp.zeros((SP, HIDDEN), jnp.bfloat16).at[:S, :].set(
        params["w1"].astype(jnp.bfloat16))
    w2 = params["w2"].astype(jnp.bfloat16)
    w3 = jnp.zeros((HIDDEN, AP), jnp.bfloat16).at[:, :A].set(
        params["w3"].astype(jnp.bfloat16))
    b1 = params["b1"].astype(jnp.float32)
    b2 = params["b2"].astype(jnp.float32)
    b3 = jnp.zeros((1, AP), jnp.float32).at[:, :A].set(
        params["b3"].astype(jnp.float32))

    # x / out move with the batch grid index; weights & biases are pinned to
    # block (0, 0) so they are fetched once and stay resident in VMEM.
    x_spec = pl.BlockSpec((tb, SP), lambda i: (i, 0))
    o_spec = pl.BlockSpec((tb, AP), lambda i: (i, 0))
    resident = lambda shape: pl.BlockSpec(shape, lambda i: (0, 0))

    weight_bytes = (w1.size + w2.size + w3.size) * 2 + (b1.size + b2.size + b3.size) * 4
    cost = pl.CostEstimate(
        flops=2 * B_pad * (SP * HIDDEN + HIDDEN * HIDDEN + HIDDEN * AP),
        transcendentals=B_pad * AP,
        bytes_accessed=x.size * 2 + weight_bytes + B_pad * AP * 4,
    )

    out = pl.pallas_call(
        actor_kernel,
        out_shape=jax.ShapeDtypeStruct((B_pad, AP), jnp.float32),
        grid=grid,
        in_specs=[
            x_spec,
            resident(w1.shape), resident(b1.shape),
            resident(w2.shape), resident(b2.shape),
            resident(w3.shape), resident(b3.shape),
        ],
        out_specs=o_spec,
        compiler_params=pltpu.CompilerParams(
            dimension_semantics=("parallel",),
            vmem_limit_bytes=8 << 20,
        ),
        cost_estimate=cost,
    )(x, w1, b1, w2, b2, w3, b3)

    return out[:B, :A]


def init_actor_params(key, state_size, action_size):
    """Deterministic init matching PyTorch nn.Linear default:
    U(-1/sqrt(fan_in), 1/sqrt(fan_in)) for both weight and bias.
    Weights are stored transposed: (in_features, out_features)."""
    dims = [(state_size, HIDDEN), (HIDDEN, HIDDEN), (HIDDEN, action_size)]
    params = {}
    for i, (fan_in, fan_out) in enumerate(dims, start=1):
        key, kw, kb = jax.random.split(key, 3)
        bound = 1.0 / jnp.sqrt(float(fan_in))
        params[f"w{i}"] = jax.random.uniform(
            kw, (fan_in, fan_out), jnp.float32, minval=-bound, maxval=bound)
        params[f"b{i}"] = jax.random.uniform(
            kb, (1, fan_out), jnp.float32, minval=-bound, maxval=bound)
    return params


def actor_reference(state, params):
    h1 = jnp.maximum(state @ params["w1"] + params["b1"], 0.0)
    h2 = jnp.maximum(h1 @ params["w2"] + params["b2"], 0.0)
    return jnp.tanh(h2 @ params["w3"] + params["b3"])


if __name__ == "__main__":
    batch = 2
    state_size = 32
    action_size = 8

    key = jax.random.PRNGKey(0)
    key, k_state = jax.random.split(key)
    state = jax.random.normal(k_state, (batch, state_size), jnp.float32)
    params = init_actor_params(key, state_size, action_size)

    out = actor_forward(state, params)
    out = jax.block_until_ready(out)

    ref = actor_reference(state, params)
    assert out.shape == (batch, action_size), out.shape
    # bf16 weights/activations (f32 accumulation): compare against the f32
    # reference with a tolerance appropriate for bf16, tanh-bounded outputs.
    assert jnp.allclose(out, ref, atol=2e-2, rtol=0.0), (
        "mismatch vs reference: max abs err "
        f"{float(jnp.max(jnp.abs(out - ref)))}")

    print("KERNEL_OK")
</pallas_src>

<mosaic_0001>
module attributes {stable_mosaic.version = 11 : i64} {
  func.func @actor_kernel(%arg0: i32, %arg1: memref<8x128xbf16, #tpu.memory_space<vmem>>, %arg2: memref<128x256xbf16, #tpu.memory_space<vmem>>, %arg3: memref<1x256xf32, #tpu.memory_space<vmem>>, %arg4: memref<256x256xbf16, #tpu.memory_space<vmem>>, %arg5: memref<1x256xf32, #tpu.memory_space<vmem>>, %arg6: memref<256x128xbf16, #tpu.memory_space<vmem>>, %arg7: memref<1x128xf32, #tpu.memory_space<vmem>>, %arg8: memref<8x128xf32, #tpu.memory_space<vmem>>) attributes {dimension_semantics = [#tpu.dimension_semantics<parallel>], iteration_bounds = array<i64: 1>, scalar_prefetch = 0 : i64, scratch_operands = 0 : i64, tpu.core_type = #tpu.core_type<tc>, window_params = [{transform_indices = @transform_0, window_bounds = array<i64: 8, 128>}, {pipeline_mode = #tpu.pipeline_mode<synchronous>, transform_indices = @transform_1, window_bounds = array<i64: 128, 256>}, {pipeline_mode = #tpu.pipeline_mode<synchronous>, transform_indices = @transform_2, window_bounds = array<i64: 1, 256>}, {pipeline_mode = #tpu.pipeline_mode<synchronous>, transform_indices = @transform_3, window_bounds = array<i64: 256, 256>}, {pipeline_mode = #tpu.pipeline_mode<synchronous>, transform_indices = @transform_4, window_bounds = array<i64: 1, 256>}, {pipeline_mode = #tpu.pipeline_mode<synchronous>, transform_indices = @transform_5, window_bounds = array<i64: 256, 128>}, {pipeline_mode = #tpu.pipeline_mode<synchronous>, transform_indices = @transform_6, window_bounds = array<i64: 1, 128>}, {transform_indices = @transform_7, window_bounds = array<i64: 8, 128>}]} {
    %c0 = arith.constant 0 : index
    %c0_0 = arith.constant 0 : index
    %0 = vector.load %arg1[%c0, %c0_0] : memref<8x128xbf16, #tpu.memory_space<vmem>>, vector<8x128xbf16>
    %c0_1 = arith.constant 0 : index
    %c0_2 = arith.constant 0 : index
    %1 = vector.load %arg2[%c0_1, %c0_2] : memref<128x256xbf16, #tpu.memory_space<vmem>>, vector<128x256xbf16>
    %cst = arith.constant dense<0.000000e+00> : vector<8x256xf32>
    %2 = tpu.matmul %0, %1, %cst {dimension_numbers = #tpu.dot_dimension_numbers<[1], [0], [0], [1], [0, 0, 1, 1], [], []>} : vector<8x128xbf16>, vector<128x256xbf16>, vector<8x256xf32> -> vector<8x256xf32>
    %c0_3 = arith.constant 0 : index
    %c0_4 = arith.constant 0 : index
    %3 = vector.load %arg3[%c0_3, %c0_4] : memref<1x256xf32, #tpu.memory_space<vmem>>, vector<1x256xf32>
    %4 = vector.broadcast %3 : vector<1x256xf32> to vector<8x256xf32>
    %5 = arith.addf %2, %4 : vector<8x256xf32>
    %cst_5 = arith.constant 0.000000e+00 : f32
    %6 = vector.broadcast %cst_5 : f32 to vector<8x256xf32>
    %7 = arith.maximumf %5, %6 : vector<8x256xf32>
    %8 = arith.truncf %7 : vector<8x256xf32> to vector<8x256xbf16>
    %c0_6 = arith.constant 0 : index
    %c0_7 = arith.constant 0 : index
    %9 = vector.load %arg4[%c0_6, %c0_7] : memref<256x256xbf16, #tpu.memory_space<vmem>>, vector<256x256xbf16>
    %cst_8 = arith.constant dense<0.000000e+00> : vector<8x256xf32>
    %10 = tpu.matmul %8, %9, %cst_8 {dimension_numbers = #tpu.dot_dimension_numbers<[1], [0], [0], [1], [0, 0, 1, 1], [], []>} : vector<8x256xbf16>, vector<256x256xbf16>, vector<8x256xf32> -> vector<8x256xf32>
    %c0_9 = arith.constant 0 : index
    %c0_10 = arith.constant 0 : index
    %11 = vector.load %arg5[%c0_9, %c0_10] : memref<1x256xf32, #tpu.memory_space<vmem>>, vector<1x256xf32>
    %12 = vector.broadcast %11 : vector<1x256xf32> to vector<8x256xf32>
    %13 = arith.addf %10, %12 : vector<8x256xf32>
    %cst_11 = arith.constant 0.000000e+00 : f32
    %14 = vector.broadcast %cst_11 : f32 to vector<8x256xf32>
    %15 = arith.maximumf %13, %14 : vector<8x256xf32>
    %16 = arith.truncf %15 : vector<8x256xf32> to vector<8x256xbf16>
    %c0_12 = arith.constant 0 : index
    %c0_13 = arith.constant 0 : index
    %17 = vector.load %arg6[%c0_12, %c0_13] : memref<256x128xbf16, #tpu.memory_space<vmem>>, vector<256x128xbf16>
    %cst_14 = arith.constant dense<0.000000e+00> : vector<8x128xf32>
    %18 = tpu.matmul %16, %17, %cst_14 {dimension_numbers = #tpu.dot_dimension_numbers<[1], [0], [0], [1], [0, 0, 1, 1], [], []>} : vector<8x256xbf16>, vector<256x128xbf16>, vector<8x128xf32> -> vector<8x128xf32>
    %c0_15 = arith.constant 0 : index
    %c0_16 = arith.constant 0 : index
    %19 = vector.load %arg7[%c0_15, %c0_16] : memref<1x128xf32, #tpu.memory_space<vmem>>, vector<1x128xf32>
    %20 = vector.broadcast %19 : vector<1x128xf32> to vector<8x128xf32>
    %21 = arith.addf %18, %20 : vector<8x128xf32>
    %22 = math.tanh %21 : vector<8x128xf32>
    %c0_17 = arith.constant 0 : index
    %c0_18 = arith.constant 0 : index
    %23 = vector.load %arg8[%c0_17, %c0_18] : memref<8x128xf32, #tpu.memory_space<vmem>>, vector<8x128xf32>
    tpu.vector_store %arg8[%c0_17, %c0_18], %22 {strides = array<i32>} : memref<8x128xf32, #tpu.memory_space<vmem>>, vector<8x128xf32>,
    return
  }
  func.func @transform_0(%arg0: i32) -> (i32, i32) {
    %c0_i32 = arith.constant 0 : i32
    %c0_i32_0 = arith.constant 0 : i32
    return %arg0, %c0_i32 : i32, i32
  }
  func.func @transform_1(%arg0: i32) -> (i32, i32) {
    %c0_i32 = arith.constant 0 : i32
    %c0_i32_0 = arith.constant 0 : i32
    %c0_i32_1 = arith.constant 0 : i32
    return %c0_i32, %c0_i32_0 : i32, i32
  }
  func.func @transform_2(%arg0: i32) -> (i32, i32) {
    %c0_i32 = arith.constant 0 : i32
    %c0_i32_0 = arith.constant 0 : i32
    %c0_i32_1 = arith.constant 0 : i32
    return %c0_i32, %c0_i32_0 : i32, i32
  }
  func.func @transform_3(%arg0: i32) -> (i32, i32) {
    %c0_i32 = arith.constant 0 : i32
    %c0_i32_0 = arith.constant 0 : i32
    %c0_i32_1 = arith.constant 0 : i32
    return %c0_i32, %c0_i32_0 : i32, i32
  }
  func.func @transform_4(%arg0: i32) -> (i32, i32) {
    %c0_i32 = arith.constant 0 : i32
    %c0_i32_0 = arith.constant 0 : i32
    %c0_i32_1 = arith.constant 0 : i32
    return %c0_i32, %c0_i32_0 : i32, i32
  }
  func.func @transform_5(%arg0: i32) -> (i32, i32) {
    %c0_i32 = arith.constant 0 : i32
    %c0_i32_0 = arith.constant 0 : i32
    %c0_i32_1 = arith.constant 0 : i32
    return %c0_i32, %c0_i32_0 : i32, i32
  }
  func.func @transform_6(%arg0: i32) -> (i32, i32) {
    %c0_i32 = arith.constant 0 : i32
    %c0_i32_0 = arith.constant 0 : i32
    %c0_i32_1 = arith.constant 0 : i32
    return %c0_i32, %c0_i32_0 : i32, i32
  }
  func.func @transform_7(%arg0: i32) -> (i32, i32) {
    %c0_i32 = arith.constant 0 : i32
    %c0_i32_0 = arith.constant 0 : i32
    return %arg0, %c0_i32 : i32, i32
  }
}

</mosaic_0001>

<llo_original>
// kernel: actor_forward.1
$region0: #{actor_forward.1}
  #allocation0 [shape = 'u32[]', space=smem, size = 0x4, offset = 0x4, fixed_abs, tag = 'smem constant byte address 0x4 - core index']
  #allocation1 [shape = 'u32[144,128]{1,0:T(1,128)}', space=vmem, size = 0x12000, scoped, tag = 'internal scratch']
  %s0 = inlined_call_operand.vmem [shape: bf16[8,128], index: 0, kind: input, shape index: {}]
  %s1 = inlined_call_operand.vmem [shape: bf16[128,256], index: 1, kind: input, shape index: {}]
  %s2 = inlined_call_operand.vmem [shape: f32[1,256], index: 2, kind: input, shape index: {}]
  %s3 = inlined_call_operand.vmem [shape: bf16[256,256], index: 3, kind: input, shape index: {}]
  %s4 = inlined_call_operand.vmem [shape: f32[1,256], index: 4, kind: input, shape index: {}]
  %s5 = inlined_call_operand.vmem [shape: bf16[256,128], index: 5, kind: input, shape index: {}]
  %s6 = inlined_call_operand.vmem [shape: f32[1,128], index: 6, kind: input, shape index: {}]
  %s7 = inlined_call_operand.vmem [shape: f32[8,128], index: 7, kind: output, shape index: {}]
  %s8 = sld [smem:[#allocation0]]
  $region38: #{actor_forward.1} parent=0
    _
  %s10 = ssub.s32 1, %s8
  %s11 = scalar_select 0, %s10, %s8
  // Predicated region
  $region2: #{actor_forward.1} parent=0 // pred_check
    _
  $region3: #{actor_forward.1} parent=0 // pred_check_branch
    %13 = sbr.rel (0) target = $region5
  $region4: #{actor_forward.1} parent=0 // pred_region
    _
  $region5: #{actor_forward.1} parent=0 // pred_fallthru
    _
  // Predicated region
  $region6: #{actor_forward.1} parent=0 // pred_check
    _
  $region7: #{actor_forward.1} parent=0 // pred_check_branch
    %15 = sbr.rel (0) target = $region9
  $region8: #{actor_forward.1} parent=0 // pred_region
    _
  $region9: #{actor_forward.1} parent=0 // pred_fallthru
    _
  // Predicated region
  $region10: #{actor_forward.1} parent=0 // pred_check
    _
  $region11: #{actor_forward.1} parent=0 // pred_check_branch
    %17 = sbr.rel (0) target = $region13
  $region12: #{actor_forward.1} parent=0 // pred_region
    _
  $region13: #{actor_forward.1} parent=0 // pred_fallthru
    _
  // Predicated region
  $region14: #{actor_forward.1} parent=0 // pred_check
    _
  $region15: #{actor_forward.1} parent=0 // pred_check_branch
    %19 = sbr.rel (0) target = $region17
  $region16: #{actor_forward.1} parent=0 // pred_region
    _
  $region17: #{actor_forward.1} parent=0 // pred_fallthru
    _
  // Predicated region
  $region18: #{actor_forward.1} parent=0 // pred_check
    _
  $region19: #{actor_forward.1} parent=0 // pred_check_branch
    %21 = sbr.rel (0) target = $region21
  $region20: #{actor_forward.1} parent=0 // pred_region
    _
  $region21: #{actor_forward.1} parent=0 // pred_fallthru
    _
  // Predicated region
  $region22: #{actor_forward.1} parent=0 // pred_check
    _
  $region23: #{actor_forward.1} parent=0 // pred_check_branch
    %23 = sbr.rel (0) target = $region25
  $region24: #{actor_forward.1} parent=0 // pred_region
    _
  $region25: #{actor_forward.1} parent=0 // pred_fallthru
    _
  // Predicated region
  $region26: #{actor_forward.1} parent=0 // pred_check
    _
  $region27: #{actor_forward.1} parent=0 // pred_check_branch
    %25 = sbr.rel (0) target = $region29
  $region28: #{actor_forward.1} parent=0 // pred_region
    _
  $region29: #{actor_forward.1} parent=0 // pred_fallthru
    _
  %v27 = vld [vmem:[%s0] sm:$0xf]
  %v28 = vld [vmem:[%s1] sm:$0xff]
  %v29 = vld [vmem:[%s1 + $0x8] sm:$0xff]
  %v30 = vld [vmem:[%s1 + $0x10] sm:$0xff]
  %v31 = vld [vmem:[%s1 + $0x18] sm:$0xff]
  %v32 = vld [vmem:[%s1 + $0x20] sm:$0xff]
  %v33 = vld [vmem:[%s1 + $0x28] sm:$0xff]
  %v34 = vld [vmem:[%s1 + $0x30] sm:$0xff]
  %v35 = vld [vmem:[%s1 + $0x38] sm:$0xff]
  %v36 = vld [vmem:[%s1 + $0x40] sm:$0xff]
  %v37 = vld [vmem:[%s1 + $0x48] sm:$0xff]
  %v38 = vld [vmem:[%s1 + $0x50] sm:$0xff]
  %v39 = vld [vmem:[%s1 + $0x58] sm:$0xff]
  %v40 = vld [vmem:[%s1 + $0x60] sm:$0xff]
  %v41 = vld [vmem:[%s1 + $0x68] sm:$0xff]
  %v42 = vld [vmem:[%s1 + $0x70] sm:$0xff]
  %v43 = vld [vmem:[%s1 + $0x78] sm:$0xff]
  %v44 = vld [vmem:[%s2] sm:$0x3]
  %v46 = vlaneseq
  %v47 = vshrl.u32 %v46, 7
  %v48 = vsub.s32 0, %v47
  %v49 = vrot.slane %v44, %v48
  %v50 = vlaneseq
  %v51 = vshrl.u32 %v50, 7
  %v52 = vsub.s32 1, %v51
  %v53 = vrot.slane %v44, %v52
  %v72 = vunpack.c.l.b16 %v28
  %v73 = vunpack.c.h.b16 %v28
  %v74 = vunpack.c.l.b16 %v29
  %v75 = vunpack.c.h.b16 %v29
  %v76 = vunpack.c.l.b16 %v30
  %v77 = vunpack.c.h.b16 %v30
  %v78 = vunpack.c.l.b16 %v31
  %v79 = vunpack.c.h.b16 %v31
  %v80 = vunpack.c.l.b16 %v32
  %v81 = vunpack.c.h.b16 %v32
  %v82 = vunpack.c.l.b16 %v33
  %v83 = vunpack.c.h.b16 %v33
  %v84 = vunpack.c.l.b16 %v34
  %v85 = vunpack.c.h.b16 %v34
  %v86 = vunpack.c.l.b16 %v35
  %v87 = vunpack.c.h.b16 %v35
  %v88 = vunpack.c.l.b16 %v36
  %v89 = vunpack.c.h.b16 %v36
  %v90 = vunpack.c.l.b16 %v37
  %v91 = vunpack.c.h.b16 %v37
  %v92 = vunpack.c.l.b16 %v38
  %v93 = vunpack.c.h.b16 %v38
  %v94 = vunpack.c.l.b16 %v39
  %v95 = vunpack.c.h.b16 %v39
  %v96 = vunpack.c.l.b16 %v40
  %v97 = vunpack.c.h.b16 %v40
  %v98 = vunpack.c.l.b16 %v41
  %v99 = vunpack.c.h.b16 %v41
  %v100 = vunpack.c.l.b16 %v42
  %v101 = vunpack.c.h.b16 %v42
  %v102 = vunpack.c.l.b16 %v43
  %v103 = vunpack.c.h.b16 %v43
  %v104 = vpack.c.b16 %v74, %v72
  %v105 = vpack.c.b16 %v75, %v73
  %v106 = vpack.c.b16 %v78, %v76
  %v107 = vpack.c.b16 %v79, %v77
  %v108 = vpack.c.b16 %v82, %v80
  %v109 = vpack.c.b16 %v83, %v81
  %v110 = vpack.c.b16 %v86, %v84
  %v111 = vpack.c.b16 %v87, %v85
  %v112 = vpack.c.b16 %v90, %v88
  %v113 = vpack.c.b16 %v91, %v89
  %v114 = vpack.c.b16 %v94, %v92
  %v115 = vpack.c.b16 %v95, %v93
  %v116 = vpack.c.b16 %v98, %v96
  %v117 = vpack.c.b16 %v99, %v97
  %v118 = vpack.c.b16 %v102, %v100
  %v119 = vpack.c.b16 %v103, %v101
  %136 = vmatprep.subr.bf16.mxu0 %v105
  %137 = vmatpush1.bf16.msra.mxu0 %v104
  %138 = vmatprep.subr.bf16.mxu0 %v107
  %139 = vmatpush1.bf16.msra.mxu0 %v106
  %140 = vmatprep.subr.bf16.mxu0 %v109
  %141 = vmatpush1.bf16.msra.mxu0 %v108
  %142 = vmatprep.subr.bf16.mxu0 %v111
  %143 = vmatpush1.bf16.msra.mxu0 %v110
  %144 = vmatprep.subr.bf16.mxu0 %v113
  %145 = vmatpush1.bf16.msra.mxu0 %v112
  %146 = vmatprep.subr.bf16.mxu0 %v115
  %147 = vmatpush1.bf16.msra.mxu0 %v114
  %148 = vmatprep.subr.bf16.mxu0 %v117
  %149 = vmatpush1.bf16.msra.mxu0 %v116
  %150 = vmatprep.subr.bf16.mxu0 %v119
  %151 = vmatpush1.bf16.msra.mxu0 %v118
  %152 = vmatprep.subr.bf16.mxu0 0
  %153 = vmatpush1.bf16.msra.mxu0 0
  %154 = vmatprep.subr.bf16.mxu0 0
  %155 = vmatpush1.bf16.msra.mxu0 0
  %156 = vmatprep.subr.bf16.mxu0 0
  %157 = vmatpush1.bf16.msra.mxu0 0
  %158 = vmatprep.subr.bf16.mxu0 0
  %159 = vmatpush1.bf16.msra.mxu0 0
  %160 = vmatprep.subr.bf16.mxu0 0
  %161 = vmatpush1.bf16.msra.mxu0 0
  %162 = vmatprep.subr.bf16.mxu0 0
  %163 = vmatpush1.bf16.msra.mxu0 0
  %164 = vmatprep.subr.bf16.mxu0 0
  %165 = vmatpush1.bf16.msra.mxu0 0
  %166 = vmatprep.subr.bf16.mxu0 0
  %167 = vmatpush1.bf16.msra.mxu0 0
  %168 = vmatprep.mubr.bf16.mxu0 0
  %169 = vmatmul.mubr.bf16.gmra.mrb[0].mxu0 %v27
  %v170 = vpop.f32.mrb[0].mxu0
  %v171 = vadd.f32 %v49, %v170
  %v172 = vpop.f32.mrb[0].mxu0
  %v173 = vadd.f32 %v53, %v172
  %v174 = vpop.f32.mrb[0].mxu0
  %v175 = vpop.f32.mrb[0].mxu0
  %176 = vdwg.mxu0
  %v177 = vmax.f32 %v171, 0.0
  %v178 = vmax.f32 %v173, 0.0
  %v179 = vpack.c.bf16 %v177, %v177
  %v180 = vpack.c.bf16 %v178, %v178
  %v181 = vld [vmem:[%s3] sm:$0xff]
  %v182 = vld [vmem:[%s3 + $0x8] sm:$0xff]
  %v183 = vld [vmem:[%s3 + $0x10] sm:$0xff]
  %v184 = vld [vmem:[%s3 + $0x18] sm:$0xff]
  %v185 = vld [vmem:[%s3 + $0x20] sm:$0xff]
  %v186 = vld [vmem:[%s3 + $0x28] sm:$0xff]
  %v187 = vld [vmem:[%s3 + $0x30] sm:$0xff]
  %v188 = vld [vmem:[%s3 + $0x38] sm:$0xff]
  %v189 = vld [vmem:[%s3 + $0x40] sm:$0xff]
  %v190 = vld [vmem:[%s3 + $0x48] sm:$0xff]
  %v191 = vld [vmem:[%s3 + $0x50] sm:$0xff]
  %v192 = vld [vmem:[%s3 + $0x58] sm:$0xff]
  %v193 = vld [vmem:[%s3 + $0x60] sm:$0xff]
  %v194 = vld [vmem:[%s3 + $0x68] sm:$0xff]
  %v195 = vld [vmem:[%s3 + $0x70] sm:$0xff]
  %v196 = vld [vmem:[%s3 + $0x78] sm:$0xff]
  %v197 = vld [vmem:[%s3 + $0x80] sm:$0xff]
  %v198 = vld [vmem:[%s3 + $0x88] sm:$0xff]
  %v199 = vld [vmem:[%s3 + $0x90] sm:$0xff]
  %v200 = vld [vmem:[%s3 + $0x98] sm:$0xff]
  %v201 = vld [vmem:[%s3 + $0xa0] sm:$0xff]
  %v202 = vld [vmem:[%s3 + $0xa8] sm:$0xff]
  %v203 = vld [vmem:[%s3 + $0xb0] sm:$0xff]
  %v204 = vld [vmem:[%s3 + $0xb8] sm:$0xff]
  %v205 = vld [vmem:[%s3 + $0xc0] sm:$0xff]
  %v206 = vld [vmem:[%s3 + $0xc8] sm:$0xff]
  %v207 = vld [vmem:[%s3 + $0xd0] sm:$0xff]
  %v208 = vld [vmem:[%s3 + $0xd8] sm:$0xff]
  %v209 = vld [vmem:[%s3 + $0xe0] sm:$0xff]
  %v210 = vld [vmem:[%s3 + $0xe8] sm:$0xff]
  %v211 = vld [vmem:[%s3 + $0xf0] sm:$0xff]
  %v212 = vld [vmem:[%s3 + $0xf8] sm:$0xff]
  %v213 = vld [vmem:[%s4] sm:$0x3]
  %v215 = vlaneseq
  %v216 = vshrl.u32 %v215, 7
  %v217 = vsub.s32 0, %v216
  %v218 = vrot.slane %v213, %v217
  %v219 = vlaneseq
  %v220 = vshrl.u32 %v219, 7
  %v221 = vsub.s32 1, %v220
  %v222 = vrot.slane %v213, %v221
  %v257 = vunpack.c.l.b16 %v181
  %v258 = vunpack.c.h.b16 %v181
  %v259 = vunpack.c.l.b16 %v182
  %v260 = vunpack.c.h.b16 %v182
  %v261 = vunpack.c.l.b16 %v183
  %v262 = vunpack.c.h.b16 %v183
  %v263 = vunpack.c.l.b16 %v184
  %v264 = vunpack.c.h.b16 %v184
  %v265 = vunpack.c.l.b16 %v185
  %v266 = vunpack.c.h.b16 %v185
  %v267 = vunpack.c.l.b16 %v186
  %v268 = vunpack.c.h.b16 %v186
  %v269 = vunpack.c.l.b16 %v187
  %v270 = vunpack.c.h.b16 %v187
  %v271 = vunpack.c.l.b16 %v188
  %v272 = vunpack.c.h.b16 %v188
  %v273 = vunpack.c.l.b16 %v189
  %v274 = vunpack.c.h.b16 %v189
  %v275 = vunpack.c.l.b16 %v190
  %v276 = vunpack.c.h.b16 %v190
  %v277 = vunpack.c.l.b16 %v191
  %v278 = vunpack.c.h.b16 %v191
  %v279 = vunpack.c.l.b16 %v192
  %v280 = vunpack.c.h.b16 %v192
  %v281 = vunpack.c.l.b16 %v193
  %v282 = vunpack.c.h.b16 %v193
  %v283 = vunpack.c.l.b16 %v194
  %v284 = vunpack.c.h.b16 %v194
  %v285 = vunpack.c.l.b16 %v195
  %v286 = vunpack.c.h.b16 %v195
  %v287 = vunpack.c.l.b16 %v196
  %v288 = vunpack.c.h.b16 %v196
  %v289 = vunpack.c.l.b16 %v197
  %v290 = vunpack.c.h.b16 %v197
  %v291 = vunpack.c.l.b16 %v198
  %v292 = vunpack.c.h.b16 %v198
  %v293 = vunpack.c.l.b16 %v199
  %v294 = vunpack.c.h.b16 %v199
  %v295 = vunpack.c.l.b16 %v200
  %v296 = vunpack.c.h.b16 %v200
  %v297 = vunpack.c.l.b16 %v201
  %v298 = vunpack.c.h.b16 %v201
  %v299 = vunpack.c.l.b16 %v202
  %v300 = vunpack.c.h.b16 %v202
  %v301 = vunpack.c.l.b16 %v203
  %v302 = vunpack.c.h.b16 %v203
  %v303 = vunpack.c.l.b16 %v204
  %v304 = vunpack.c.h.b16 %v204
  %v305 = vunpack.c.l.b16 %v205
  %v306 = vunpack.c.h.b16 %v205
  %v307 = vunpack.c.l.b16 %v206
  %v308 = vunpack.c.h.b16 %v206
  %v309 = vunpack.c.l.b16 %v207
  %v310 = vunpack.c.h.b16 %v207
  %v311 = vunpack.c.l.b16 %v208
  %v312 = vunpack.c.h.b16 %v208
  %v313 = vunpack.c.l.b16 %v209
  %v314 = vunpack.c.h.b16 %v209
  %v315 = vunpack.c.l.b16 %v210
  %v316 = vunpack.c.h.b16 %v210
  %v317 = vunpack.c.l.b16 %v211
  %v318 = vunpack.c.h.b16 %v211
  %v319 = vunpack.c.l.b16 %v212
  %v320 = vunpack.c.h.b16 %v212
  %v321 = vpack.c.b16 %v259, %v257
  %v322 = vpack.c.b16 %v260, %v258
  %v323 = vpack.c.b16 %v263, %v261
  %v324 = vpack.c.b16 %v264, %v262
  %v325 = vpack.c.b16 %v267, %v265
  %v326 = vpack.c.b16 %v268, %v266
  %v327 = vpack.c.b16 %v271, %v269
  %v328 = vpack.c.b16 %v272, %v270
  %v329 = vpack.c.b16 %v275, %v273
  %v330 = vpack.c.b16 %v276, %v274
  %v331 = vpack.c.b16 %v279, %v277
  %v332 = vpack.c.b16 %v280, %v278
  %v333 = vpack.c.b16 %v283, %v281
  %v334 = vpack.c.b16 %v284, %v282
  %v335 = vpack.c.b16 %v287, %v285
  %v336 = vpack.c.b16 %v288, %v286
  %v337 = vpack.c.b16 %v291, %v289
  %v338 = vpack.c.b16 %v292, %v290
  %v339 = vpack.c.b16 %v295, %v293
  %v340 = vpack.c.b16 %v296, %v294
  %v341 = vpack.c.b16 %v299, %v297
  %v342 = vpack.c.b16 %v300, %v298
  %v343 = vpack.c.b16 %v303, %v301
  %v344 = vpack.c.b16 %v304, %v302
  %v345 = vpack.c.b16 %v307, %v305
  %v346 = vpack.c.b16 %v308, %v306
  %v347 = vpack.c.b16 %v311, %v309
  %v348 = vpack.c.b16 %v312, %v310
  %v349 = vpack.c.b16 %v315, %v313
  %v350 = vpack.c.b16 %v316, %v314
  %v351 = vpack.c.b16 %v319, %v317
  %v352 = vpack.c.b16 %v320, %v318
  %385 = vmatprep.subr.bf16.mxu0 %v322
  %386 = vmatpush1.bf16.msra.mxu0 %v321
  %387 = vmatprep.subr.bf16.mxu0 %v324
  %388 = vmatpush1.bf16.msra.mxu0 %v323
  %389 = vmatprep.subr.bf16.mxu0 %v326
  %390 = vmatpush1.bf16.msra.mxu0 %v325
  %391 = vmatprep.subr.bf16.mxu0 %v328
  %392 = vmatpush1.bf16.msra.mxu0 %v327
  %393 = vmatprep.subr.bf16.mxu0 %v330
  %394 = vmatpush1.bf16.msra.mxu0 %v329
  %395 = vmatprep.subr.bf16.mxu0 %v332
  %396 = vmatpush1.bf16.msra.mxu0 %v331
  %397 = vmatprep.subr.bf16.mxu0 %v334
  %398 = vmatpush1.bf16.msra.mxu0 %v333
  %399 = vmatprep.subr.bf16.mxu0 %v336
  %400 = vmatpush1.bf16.msra.mxu0 %v335
  %401 = vmatprep.subr.bf16.mxu0 %v338
  %402 = vmatpush1.bf16.msra.mxu0 %v337
  %403 = vmatprep.subr.bf16.mxu0 %v340
  %404 = vmatpush1.bf16.msra.mxu0 %v339
  %405 = vmatprep.subr.bf16.mxu0 %v342
  %406 = vmatpush1.bf16.msra.mxu0 %v341
  %407 = vmatprep.subr.bf16.mxu0 %v344
  %408 = vmatpush1.bf16.msra.mxu0 %v343
  %409 = vmatprep.subr.bf16.mxu0 %v346
  %410 = vmatpush1.bf16.msra.mxu0 %v345
  %411 = vmatprep.subr.bf16.mxu0 %v348
  %412 = vmatpush1.bf16.msra.mxu0 %v347
  %413 = vmatprep.subr.bf16.mxu0 %v350
  %414 = vmatpush1.bf16.msra.mxu0 %v349
  %415 = vmatprep.subr.bf16.mxu0 %v352
  %416 = vmatpush1.bf16.msra.mxu0 %v351
  %417 = vmatprep.mubr.bf16.mxu0 %v180
  %418 = vmatmul.mubr.bf16.gmra.mrb[0].mxu0 %v179
  %v419 = vpop.f32.mrb[0].mxu0
  %v420 = vadd.f32 %v218, %v419
  %v421 = vpop.f32.mrb[0].mxu0
  %v422 = vadd.f32 %v222, %v421
  %v423 = vpop.f32.mrb[0].mxu0
  %v424 = vpop.f32.mrb[0].mxu0
  %425 = vdwg.mxu0
  %v426 = vmax.f32 %v420, 0.0
  %v427 = vmax.f32 %v422, 0.0
  %v428 = vpack.c.bf16 %v426, %v426
  %v429 = vpack.c.bf16 %v427, %v427
  %v430 = vld [vmem:[%s5] sm:$0xf]
  %v431 = vld [vmem:[%s5 + $0x4] sm:$0xf]
  %v432 = vld [vmem:[%s5 + $0x8] sm:$0xf]
  %v433 = vld [vmem:[%s5 + $0xc] sm:$0xf]
  %v434 = vld [vmem:[%s5 + $0x10] sm:$0xf]
  %v435 = vld [vmem:[%s5 + $0x14] sm:$0xf]
  %v436 = vld [vmem:[%s5 + $0x18] sm:$0xf]
  %v437 = vld [vmem:[%s5 + $0x1c] sm:$0xf]
  %v438 = vld [vmem:[%s5 + $0x20] sm:$0xf]
  %v439 = vld [vmem:[%s5 + $0x24] sm:$0xf]
  %v440 = vld [vmem:[%s5 + $0x28] sm:$0xf]
  %v441 = vld [vmem:[%s5 + $0x2c] sm:$0xf]
  %v442 = vld [vmem:[%s5 + $0x30] sm:$0xf]
  %v443 = vld [vmem:[%s5 + $0x34] sm:$0xf]
  %v444 = vld [vmem:[%s5 + $0x38] sm:$0xf]
  %v445 = vld [vmem:[%s5 + $0x3c] sm:$0xf]
  %v446 = vld [vmem:[%s5 + $0x40] sm:$0xf]
  %v447 = vld [vmem:[%s5 + $0x44] sm:$0xf]
  %v448 = vld [vmem:[%s5 + $0x48] sm:$0xf]
  %v449 = vld [vmem:[%s5 + $0x4c] sm:$0xf]
  %v450 = vld [vmem:[%s5 + $0x50] sm:$0xf]
  %v451 = vld [vmem:[%s5 + $0x54] sm:$0xf]
  %v452 = vld [vmem:[%s5 + $0x58] sm:$0xf]
  %v453 = vld [vmem:[%s5 + $0x5c] sm:$0xf]
  %v454 = vld [vmem:[%s5 + $0x60] sm:$0xf]
  %v455 = vld [vmem:[%s5 + $0x64] sm:$0xf]
  %v456 = vld [vmem:[%s5 + $0x68] sm:$0xf]
  %v457 = vld [vmem:[%s5 + $0x6c] sm:$0xf]
  %v458 = vld [vmem:[%s5 + $0x70] sm:$0xf]
  %v459 = vld [vmem:[%s5 + $0x74] sm:$0xf]
  %v460 = vld [vmem:[%s5 + $0x78] sm:$0xf]
  %v461 = vld [vmem:[%s5 + $0x7c] sm:$0xf]
  %v462 = vld [vmem:[%s6] sm:$0x1]
  %v464 = vlaneseq
  %v465 = vshrl.u32 %v464, 7
  %v466 = vsub.s32 0, %v465
  %v467 = vrot.slane %v462, %v466
  %v501 = vunpack.c.l.b16 %v430
  %v502 = vunpack.c.l.b16 %v431
  %v503 = vunpack.c.l.b16 %v432
  %v504 = vunpack.c.l.b16 %v433
  %v505 = vunpack.c.l.b16 %v434
  %v506 = vunpack.c.l.b16 %v435
  %v507 = vunpack.c.l.b16 %v436
  %v508 = vunpack.c.l.b16 %v437
  %v509 = vunpack.c.l.b16 %v438
  %v510 = vunpack.c.l.b16 %v439
  %v511 = vunpack.c.l.b16 %v440
  %v512 = vunpack.c.l.b16 %v441
  %v513 = vunpack.c.l.b16 %v442
  %v514 = vunpack.c.l.b16 %v443
  %v515 = vunpack.c.l.b16 %v444
  %v516 = vunpack.c.l.b16 %v445
  %v517 = vunpack.c.l.b16 %v446
  %v518 = vunpack.c.l.b16 %v447
  %v519 = vunpack.c.l.b16 %v448
  %v520 = vunpack.c.l.b16 %v449
  %v521 = vunpack.c.l.b16 %v450
  %v522 = vunpack.c.l.b16 %v451
  %v523 = vunpack.c.l.b16 %v452
  %v524 = vunpack.c.l.b16 %v453
  %v525 = vunpack.c.l.b16 %v454
  %v526 = vunpack.c.l.b16 %v455
  %v527 = vunpack.c.l.b16 %v456
  %v528 = vunpack.c.l.b16 %v457
  %v529 = vunpack.c.l.b16 %v458
  %v530 = vunpack.c.l.b16 %v459
  %v531 = vunpack.c.l.b16 %v460
  %v532 = vunpack.c.l.b16 %v461
  %v533 = vpack.c.b16 %v502, %v501
  %v534 = vpack.c.b16 %v504, %v503
  %v535 = vpack.c.b16 %v506, %v505
  %v536 = vpack.c.b16 %v508, %v507
  %v537 = vpack.c.b16 %v510, %v509
  %v538 = vpack.c.b16 %v512, %v511
  %v539 = vpack.c.b16 %v514, %v513
  %v540 = vpack.c.b16 %v516, %v515
  %v541 = vpack.c.b16 %v518, %v517
  %v542 = vpack.c.b16 %v520, %v519
  %v543 = vpack.c.b16 %v522, %v521
  %v544 = vpack.c.b16 %v524, %v523
  %v545 = vpack.c.b16 %v526, %v525
  %v546 = vpack.c.b16 %v528, %v527
  %v547 = vpack.c.b16 %v530, %v529
  %v548 = vpack.c.b16 %v532, %v531
  %565 = vmatprep.subr.bf16.mxu0 0
  %566 = vmatpush1.bf16.msra.mxu0 %v533
  %567 = vmatprep.subr.bf16.mxu0 0
  %568 = vmatpush1.bf16.msra.mxu0 %v534
  %569 = vmatprep.subr.bf16.mxu0 0
  %570 = vmatpush1.bf16.msra.mxu0 %v535
  %571 = vmatprep.subr.bf16.mxu0 0
  %572 = vmatpush1.bf16.msra.mxu0 %v536
  %573 = vmatprep.subr.bf16.mxu0 0
  %574 = vmatpush1.bf16.msra.mxu0 %v537
  %575 = vmatprep.subr.bf16.mxu0 0
  %576 = vmatpush1.bf16.msra.mxu0 %v538
  %577 = vmatprep.subr.bf16.mxu0 0
  %578 = vmatpush1.bf16.msra.mxu0 %v539
  %579 = vmatprep.subr.bf16.mxu0 0
  %580 = vmatpush1.bf16.msra.mxu0 %v540
  %581 = vmatprep.subr.bf16.mxu0 0
  %582 = vmatpush1.bf16.msra.mxu0 %v541
  %583 = vmatprep.subr.bf16.mxu0 0
  %584 = vmatpush1.bf16.msra.mxu0 %v542
  %585 = vmatprep.subr.bf16.mxu0 0
  %586 = vmatpush1.bf16.msra.mxu0 %v543
  %587 = vmatprep.subr.bf16.mxu0 0
  %588 = vmatpush1.bf16.msra.mxu0 %v544
  %589 = vmatprep.subr.bf16.mxu0 0
  %590 = vmatpush1.bf16.msra.mxu0 %v545
  %591 = vmatprep.subr.bf16.mxu0 0
  %592 = vmatpush1.bf16.msra.mxu0 %v546
  %593 = vmatprep.subr.bf16.mxu0 0
  %594 = vmatpush1.bf16.msra.mxu0 %v547
  %595 = vmatprep.subr.bf16.mxu0 0
  %596 = vmatpush1.bf16.msra.mxu0 %v548
  %597 = vmatprep.mubr.bf16.mxu0 %v429
  %598 = vmatmul.mubr.bf16.gmra.mrb[0].mxu0 %v428
  %v599 = vpop.f32.mrb[0].mxu0
  %v600 = vadd.f32 %v467, %v599
  %v601 = vpop.f32.mrb[0].mxu0
  %v602 = vpop.f32.mrb[0].mxu0
  %v603 = vpop.f32.mrb[0].mxu0
  %604 = vdwg.mxu0
  %v605 = vtanh.pop %v600
  %606 = vst [vmem:[%s7] sm:$0xff] %v605
  // Predicated region
  $region30: #{actor_forward.1} parent=0 // pred_check
    _
  $region31: #{actor_forward.1} parent=0 // pred_check_branch
    %608 = sbr.rel (0) target = $region33
  $region32: #{actor_forward.1} parent=0 // pred_region
    _
  $region33: #{actor_forward.1} parent=0 // pred_fallthru
    _
  // Predicated region
  $region34: #{actor_forward.1} parent=0 // pred_check
    _
  $region35: #{actor_forward.1} parent=0 // pred_check_branch
    %610 = sbr.rel (0) target = $region37
  $region36: #{actor_forward.1} parent=0 // pred_region
    _
  $region37: #{actor_forward.1} parent=0 // pred_fallthru
    _

</llo_original>
